<compile_context>
chip_gen: v7x
topology: tpu7x:2x2x1
jax: 0.10.0
libtpu: 0.0.40
codegen_flags: <defaults>
</compile_context>

<pallas_src>
import math

import jax
import jax.numpy as jnp
from jax.experimental import pallas as pl
from jax.experimental.pallas import tpu as pltpu


def _round_up(x, m):
    return (x + m - 1) // m * m


def _make_gcn_kernel(reassociate, has_bias):
    """Build the tiled GCN kernel body.

    Grid: (B, N_pad // TM, N_pad // TK). The k axis (last) reduces over
    adjacency columns. Partial sums live in an f32 VMEM scratch; the output
    tile is produced only on the last k step.
    """

    def kernel(adj_ref, x_ref, w_ref, *rest):
        # adj_ref: (1, TM, TK)    current adjacency tile
        # x_ref:   (1, TK, F_in_p) node features for the k-th node tile
        # w_ref:   (F_in_p, F_out_p) resident weight
        # [b_ref]: (1, 1, F_out_p)   resident bias (optional)
        # o_ref:   (1, TM, F_out_p)  output tile (constant across k)
        # acc_ref: (TM, F_in_p) or (TM, F_out_p) f32 accumulator
        if has_bias:
            b_ref, o_ref, acc_ref = rest
        else:
            o_ref, acc_ref = rest

        k = pl.program_id(2)

        @pl.when(k == 0)
        def _init():
            acc_ref[...] = jnp.zeros_like(acc_ref)

        if reassociate:
            # Contract over the smaller feature dim: acc += adj_tile @ x_tile.
            acc_ref[...] += jnp.dot(
                adj_ref[0], x_ref[0], preferred_element_type=jnp.float32)
        else:
            # Classic order: support = x_tile @ W ; acc += adj_tile @ support.
            support = jnp.dot(
                x_ref[0], w_ref[...], preferred_element_type=jnp.float32)
            acc_ref[...] += jnp.dot(
                adj_ref[0], support.astype(adj_ref.dtype),
                preferred_element_type=jnp.float32)

        @pl.when(k == pl.num_programs(2) - 1)
        def _finalize():
            if reassociate:
                # Apply the weight once per output tile.
                out = jnp.dot(
                    acc_ref[...].astype(w_ref.dtype), w_ref[...],
                    preferred_element_type=jnp.float32)
            else:
                out = acc_ref[...]
            if has_bias:
                out = out + b_ref[0]          # (1, F_out_p) broadcasts over TM
            o_ref[0] = out.astype(o_ref.dtype)

    return kernel


def graph_convolution(x, adj, weight, bias=None, *,
                      compute_dtype=jnp.bfloat16,
                      tile_n=128,
                      reassociate=None):
    """Pallas TPU GCN forward.

    x:      (B, N, F_in)  float32
    adj:    (B, N, N)     float32
    weight: (F_in, F_out) float32
    bias:   (1, 1, F_out) float32 or None
    compute_dtype: dtype fed to the MXU (bf16 default; accumulation is f32).
    tile_n: adjacency tile edge (128 is safe on v5e/v6e/v7x; 256 also works
            on v6e/v7x for large N).
    returns (B, N, F_out) in x.dtype
    """
    B, N, F_in = x.shape
    F_in_w, F_out = weight.shape
    assert F_in_w == F_in, "weight shape mismatch"
    assert adj.shape == (B, N, N), "adj shape mismatch"
    out_dtype = x.dtype

    if reassociate is None:
        # Contract against the smaller feature dimension in the N^2 matmul.
        reassociate = F_in <= F_out

    # ---- pad to MXU / lane friendly shapes --------------------------------
    F_in_p = _round_up(F_in, 128)     # lane-dense x / accumulator
    F_out_p = _round_up(F_out, 128)   # lane-dense output stores (unmasked vst)
    if N >= tile_n:
        N_p = _round_up(N, tile_n)
        tm = tk = tile_n
    else:
        # Tiny graph: a single full-N block (sublane dim must be 8-aligned).
        N_p = _round_up(N, 8)
        tm = tk = N_p

    xp = jnp.pad(x.astype(compute_dtype),
                 ((0, 0), (0, N_p - N), (0, F_in_p - F_in)))
    adjp = jnp.pad(adj.astype(compute_dtype),
                   ((0, 0), (0, N_p - N), (0, N_p - N)))
    wp = jnp.pad(weight.astype(compute_dtype),
                 ((0, F_in_p - F_in), (0, F_out_p - F_out)))

    has_bias = bias is not None

    grid = (B, N_p // tm, N_p // tk)

    adj_spec = pl.BlockSpec((1, tm, tk), lambda b, i, k: (b, i, k))
    x_spec = pl.BlockSpec((1, tk, F_in_p), lambda b, i, k: (b, k, 0))
    w_spec = pl.BlockSpec((F_in_p, F_out_p), lambda b, i, k: (0, 0))   # resident
    out_spec = pl.BlockSpec((1, tm, F_out_p), lambda b, i, k: (b, i, 0))

    in_specs = [adj_spec, x_spec, w_spec]
    args = [adjp, xp, wp]
    if has_bias:
        bp = jnp.pad(bias.astype(compute_dtype),
                     ((0, 0), (0, 0), (0, F_out_p - F_out)))
        in_specs.append(pl.BlockSpec((1, 1, F_out_p), lambda b, i, k: (0, 0, 0)))
        args.append(bp)

    acc_cols = F_in_p if reassociate else F_out_p
    scratch_shapes = [pltpu.VMEM((tm, acc_cols), jnp.float32)]

    itemsize = jnp.dtype(compute_dtype).itemsize
    flops = 2 * B * N_p * N_p * acc_cols + 2 * B * N_p * F_in_p * F_out_p
    bytes_accessed = (adjp.size + xp.size + wp.size) * itemsize \
        + B * N_p * F_out_p * jnp.dtype(out_dtype).itemsize

    out = pl.pallas_call(
        _make_gcn_kernel(reassociate, has_bias),
        out_shape=jax.ShapeDtypeStruct((B, N_p, F_out_p), out_dtype),
        grid_spec=pltpu.PrefetchScalarGridSpec(
            num_scalar_prefetch=0,
            grid=grid,
            in_specs=in_specs,
            out_specs=out_spec,
            scratch_shapes=scratch_shapes),
        compiler_params=pltpu.CompilerParams(
            dimension_semantics=("parallel", "parallel", "arbitrary"),
            vmem_limit_bytes=32 * 1024 * 1024),
        cost_estimate=pl.CostEstimate(
            flops=flops, transcendentals=0, bytes_accessed=bytes_accessed),
    )(*args)

    return out[:, :N, :F_out]


def init_params(key, in_features, out_features, bias=False):
    """Deterministic init mirroring GraphConvolution.reset_parameters."""
    stdv = 1.0 / math.sqrt(out_features)
    k_w, k_b = jax.random.split(key)
    weight = jax.random.uniform(
        k_w, (in_features, out_features), jnp.float32, minval=-stdv, maxval=stdv)
    if bias:
        b = jax.random.uniform(
            k_b, (1, 1, out_features), jnp.float32, minval=-stdv, maxval=stdv)
    else:
        b = None
    return weight, b


if __name__ == "__main__":
    key = jax.random.PRNGKey(0)
    k_x, k_adj, k_p = jax.random.split(key, 3)

    # Small shapes consistent with the GCN forward: batch of graphs,
    # N nodes per graph, F_in input features, F_out output features.
    B, N, F_in, F_out = 2, 8, 16, 32

    x = jax.random.normal(k_x, (B, N, F_in), dtype=jnp.float32)
    adj = jax.random.uniform(k_adj, (B, N, N), dtype=jnp.float32)

    weight, bias = init_params(k_p, F_in, F_out, bias=True)

    # Pure-JAX references.
    ref_nobias = jnp.matmul(adj, jnp.matmul(x, weight))
    ref_bias = ref_nobias + bias

    # 1) Default module config (bias=False), f32 MXU path -> tight tolerance.
    out = graph_convolution(x, adj, weight, None, compute_dtype=jnp.float32)
    out = jax.block_until_ready(out)
    assert out.shape == (B, N, F_out)
    assert jnp.allclose(out, ref_nobias, atol=1e-4, rtol=1e-4)

    # 2) bias=True, bf16 MXU operands with f32 accumulation (perf path).
    out_b = graph_convolution(x, adj, weight, bias, compute_dtype=jnp.bfloat16)
    out_b = jax.block_until_ready(out_b)
    assert out_b.shape == (B, N, F_out)
    assert jnp.allclose(out_b, ref_bias, atol=5e-2, rtol=5e-2)

    # 3) Exercise the non-reassociated order (used when F_out < F_in).
    out_nr = graph_convolution(x, adj, weight, None,
                               compute_dtype=jnp.float32, reassociate=False)
    out_nr = jax.block_until_ready(out_nr)
    assert jnp.allclose(out_nr, ref_nobias, atol=1e-4, rtol=1e-4)

    print("KERNEL_OK")
</pallas_src>

<mosaic_0001>
module attributes {stable_mosaic.version = 11 : i64} {
  func.func @kernel(%arg0: i32, %arg1: i32, %arg2: i32, %arg3: memref<1x8x8xf32, #tpu.memory_space<vmem>>, %arg4: memref<1x8x128xf32, #tpu.memory_space<vmem>>, %arg5: memref<128x128xf32, #tpu.memory_space<vmem>>, %arg6: memref<1x8x128xf32, #tpu.memory_space<vmem>>, %arg7: memref<8x128xf32, #tpu.memory_space<vmem>>) attributes {dimension_semantics = [#tpu.dimension_semantics<parallel>, #tpu.dimension_semantics<parallel>, #tpu.dimension_semantics<arbitrary>], iteration_bounds = array<i64: 2, 1, 1>, scalar_prefetch = 0 : i64, scratch_operands = 1 : i64, tpu.core_type = #tpu.core_type<tc>, window_params = [{transform_indices = @transform_0, window_bounds = array<i64: 1, 8, 8>}, {transform_indices = @transform_1, window_bounds = array<i64: 1, 8, 128>}, {pipeline_mode = #tpu.pipeline_mode<synchronous>, transform_indices = @transform_2, window_bounds = array<i64: 128, 128>}, {transform_indices = @transform_3, window_bounds = array<i64: 1, 8, 128>}]} {
    %c0_i32 = arith.constant 0 : i32
    %0 = arith.cmpi eq, %arg2, %c0_i32 : i32
    %1 = arith.extui %0 : i1 to i32
    %c0_i32_0 = arith.constant 0 : i32
    %2 = arith.cmpi ne, %1, %c0_i32_0 : i32
    scf.if %2 {
      %cst_12 = arith.constant 0.000000e+00 : f32
      %14 = vector.broadcast %cst_12 : f32 to vector<8x128xf32>
      %c0_13 = arith.constant 0 : index
      %c0_14 = arith.constant 0 : index
      %15 = vector.load %arg7[%c0_13, %c0_14] : memref<8x128xf32, #tpu.memory_space<vmem>>, vector<8x128xf32>
      tpu.vector_store %arg7[%c0_13, %c0_14], %14 {strides = array<i32>} : memref<8x128xf32, #tpu.memory_space<vmem>>, vector<8x128xf32>,
    } else {
    }
    %c0 = arith.constant 0 : index
    %c0_1 = arith.constant 0 : index
    %3 = vector.load %arg7[%c0, %c0_1] : memref<8x128xf32, #tpu.memory_space<vmem>>, vector<8x128xf32>
    %c0_2 = arith.constant 0 : index
    %c0_3 = arith.constant 0 : index
    %c0_4 = arith.constant 0 : index
    %4 = vector.load %arg3[%c0_2, %c0_3, %c0_4] : memref<1x8x8xf32, #tpu.memory_space<vmem>>, vector<1x8x8xf32>
    %5 = vector.shape_cast %4 : vector<1x8x8xf32> to vector<8x8xf32>
    %c0_5 = arith.constant 0 : index
    %c0_6 = arith.constant 0 : index
    %c0_7 = arith.constant 0 : index
    %6 = vector.load %arg4[%c0_5, %c0_6, %c0_7] : memref<1x8x128xf32, #tpu.memory_space<vmem>>, vector<1x8x128xf32>
    %7 = vector.shape_cast %6 : vector<1x8x128xf32> to vector<8x128xf32>
    %cst = arith.constant dense<0.000000e+00> : vector<8x128xf32>
    %8 = tpu.matmul %5, %7, %cst {dimension_numbers = #tpu.dot_dimension_numbers<[1], [0], [0], [1], [0, 0, 1, 1], [], []>} : vector<8x8xf32>, vector<8x128xf32>, vector<8x128xf32> -> vector<8x128xf32>
    %9 = arith.addf %3, %8 : vector<8x128xf32>
    %c0_8 = arith.constant 0 : index
    %c0_9 = arith.constant 0 : index
    %10 = vector.load %arg7[%c0_8, %c0_9] : memref<8x128xf32, #tpu.memory_space<vmem>>, vector<8x128xf32>
    tpu.vector_store %arg7[%c0_8, %c0_9], %9 {strides = array<i32>} : memref<8x128xf32, #tpu.memory_space<vmem>>, vector<8x128xf32>,
    %c0_i32_10 = arith.constant 0 : i32
    %11 = arith.cmpi eq, %arg2, %c0_i32_10 : i32
    %12 = arith.extui %11 : i1 to i32
    %c0_i32_11 = arith.constant 0 : i32
    %13 = arith.cmpi ne, %12, %c0_i32_11 : i32
    scf.if %13 {
      %c0_12 = arith.constant 0 : index
      %c0_13 = arith.constant 0 : index
      %14 = vector.load %arg7[%c0_12, %c0_13] : memref<8x128xf32, #tpu.memory_space<vmem>>, vector<8x128xf32>
      %c0_14 = arith.constant 0 : index
      %c0_15 = arith.constant 0 : index
      %15 = vector.load %arg5[%c0_14, %c0_15] : memref<128x128xf32, #tpu.memory_space<vmem>>, vector<128x128xf32>
      %cst_16 = arith.constant dense<0.000000e+00> : vector<8x128xf32>
      %16 = tpu.matmul %14, %15, %cst_16 {dimension_numbers = #tpu.dot_dimension_numbers<[1], [0], [0], [1], [0, 0, 1, 1], [], []>} : vector<8x128xf32>, vector<128x128xf32>, vector<8x128xf32> -> vector<8x128xf32>
      %c0_17 = arith.constant 0 : index
      %c0_18 = arith.constant 0 : index
      %c0_19 = arith.constant 0 : index
      %17 = vector.load %arg6[%c0_17, %c0_18, %c0_19] : memref<1x8x128xf32, #tpu.memory_space<vmem>>, vector<1x8x128xf32>
      %18 = vector.shape_cast %17 : vector<1x8x128xf32> to vector<8x128xf32>
      %19 = vector.shape_cast %16 : vector<8x128xf32> to vector<1x8x128xf32>
      tpu.vector_store %arg6[%c0_17, %c0_18, %c0_19], %19 {strides = array<i32>} : memref<1x8x128xf32, #tpu.memory_space<vmem>>, vector<1x8x128xf32>,
    } else {
    }
    return
  }
  func.func @transform_0(%arg0: i32, %arg1: i32, %arg2: i32) -> (i32, i32, i32) {
    %c0_i32 = arith.constant 0 : i32
    return %arg0, %arg1, %arg2 : i32, i32, i32
  }
  func.func @transform_1(%arg0: i32, %arg1: i32, %arg2: i32) -> (i32, i32, i32) {
    %c0_i32 = arith.constant 0 : i32
    %c0_i32_0 = arith.constant 0 : i32
    return %arg0, %arg2, %c0_i32 : i32, i32, i32
  }
  func.func @transform_2(%arg0: i32, %arg1: i32, %arg2: i32) -> (i32, i32) {
    %c0_i32 = arith.constant 0 : i32
    %c0_i32_0 = arith.constant 0 : i32
    %c0_i32_1 = arith.constant 0 : i32
    return %c0_i32, %c0_i32_0 : i32, i32
  }
  func.func @transform_3(%arg0: i32, %arg1: i32, %arg2: i32) -> (i32, i32, i32) {
    %c0_i32 = arith.constant 0 : i32
    %c0_i32_0 = arith.constant 0 : i32
    return %arg0, %arg1, %c0_i32 : i32, i32, i32
  }
}

</mosaic_0001>

<llo_original>
// kernel: tpu_custom_call.1
$region0: #{tpu_custom_call.1}
  #allocation0 [shape = 'u32[]', space=smem, size = 0x4, offset = 0x4, fixed_abs, tag = 'smem constant byte address 0x4 - core index']
  #allocation1 [shape = 'u32[144,128]{1,0:T(1,128)}', space=vmem, size = 0x12000, scoped, tag = 'internal scratch']
  #allocation2 [shape = 'f32[8,128]{1,0:T(8,128)}', space=vmem, size = 0x1000, scoped, tag = 'scratch operand']
  %s0 = inlined_call_operand.hbm [shape: f32[2,8,8], index: 0, kind: input, shape index: {}]
  %s1 = inlined_call_operand.hbm [shape: f32[2,8,128], index: 1, kind: input, shape index: {}]
  %s2 = inlined_call_operand.hbm [shape: f32[128,128], index: 2, kind: input, shape index: {}]
  %s3 = inlined_call_operand.hbm [shape: f32[2,8,128], index: 3, kind: output, shape index: {}]
  %s4 = sld [smem:[#allocation0]]
  $region65: #{tpu_custom_call.1} parent=0
    _
  %s6 = ssub.s32 1, %s4
  %s7 = scalar_select 0, %s6, %s4
  $region1: #{tpu_custom_call.1} parent=0
    #allocation3 [shape = 'u8[8192]{0}', space=vmem, size = 0x2000, scoped, tag = 'input window, operand 0']
    #allocation4 [shape = 's32[2]{0}', space=sflag, size = 0x8, scoped, tag = 'scoped memory for tpu_custom_call.1']
    #allocation5 [shape = 's32[2]{0}', space=sflag, size = 0x8, scoped, tag = 'scoped memory for tpu_custom_call.1']
    #allocation6 [shape = 'u8[8192]{0}', space=vmem, size = 0x2000, scoped, tag = 'input window, operand 1']
    #allocation7 [shape = 's32[2]{0}', space=sflag, size = 0x8, scoped, tag = 'scoped memory for tpu_custom_call.1']
    #allocation8 [shape = 'u8[65536]{0}', space=vmem, size = 0x10000, scoped, tag = 'input window, operand 2, single buffered']
    #allocation9 [shape = 'u8[8192]{0}', space=vmem, size = 0x2000, scoped, tag = 'output window, operand 0']
    %8 = vsyncpa [#allocation4], 0
    %s9 = scalar_lea.sflag [#allocation4], 1
    %10 = vsyncpa %s9, 0
    %11 = vsyncpa [#allocation7], 0
    %s12 = scalar_lea.sflag [#allocation7], 1
    %13 = vsyncpa %s12, 0
    %14 = vsyncpa [#allocation5], 0
    %s15 = scalar_lea.sflag [#allocation5], 1
    %16 = vsyncpa %s15, 0
    loop: start=0, step=1, limit=4
    $region2: #{tpu_custom_call.1} parent=1 // loop_pre_header
      _
    $region3: #{tpu_custom_call.1} parent=1 // loop_header
      %s18 = sphi 0, %s22
      %p19 = scmp.ge.s32.totalorder %s18, 4
      %s25 = sphi 0, %s44
      %s26 = sphi 0, %s40
      %s27 = sphi 0, %s36
      %s28 = sphi 0, %s25
      %s29 = sphi 0, %s26
      %s30 = sphi 0, %s27
      %s31 = sphi 0, %s28
      %s32 = sphi 0, %s29
      %s33 = sphi 0, %s30
      %s51 = sphi 0, %s53
      %s54 = sphi 0, %s51
      %s55 = sphi 0, %s54
      %s71 = sphi 0, %s55
      %s79 = sphi 0, %s81
      %s82 = sphi 0, %s79
      %s83 = sphi 0, %s82
      %s99 = sphi 0, %s83
      %s103 = sphi 0, %s103
      %s105 = sphi 0, %s103
      %s106 = sphi 0, %s105
      %s120 = sphi 0, %s106
      %s128 = sphi 0, %s130
      %s131 = sphi 0, %s128
      %s132 = sphi 0, %s131
      %s148 = sphi 0, %s132
    $region4: #{tpu_custom_call.1} parent=1 // loop_header_branch
      %21 = sbr.rel (%p19) target = $region8
    $region5: #{tpu_custom_call.1} parent=1 // loop_body
      %s23 = ssub.s32 %s18, 1
      %s24 = ssub.s32 %s18, 2
      %s34 = sadd.s32 1, %s27
      %p35 = scmp.ge.s32.totalorder %s34, 1
      %s36 = scalar_select %p35, 0, %s34
      %s37 = sadd.s32 1, %s26
      %s38 = scalar_select %p35, %s37, %s26
      %p39 = scmp.ge.s32.totalorder %s38, 1
      %s40 = scalar_select %p39, 0, %s38
      %s41 = sadd.s32 1, %s25
      %s42 = scalar_select %p39, %s41, %s25
      %p43 = scmp.ge.s32.totalorder %s42, 2
      %s44 = scalar_select %p43, 0, %s42
      %s45 = ssub.s32 %s25, %s44
      %s46 = ssub.s32 %s26, %s40
      %s47 = sor.u32 %s45, %s46
      %s48 = ssub.s32 %s27, %s36
      %s49 = sor.u32 %s47, %s48
      %p50 = scmp.eq.s32.totalorder %s49, 0
      %s52 = sadd.s32 %s51, 1
      %s53 = scalar_select %p50, %s51, %s52
      %p56 = pneg %p50
      %p57 = scmp.eq.s32.totalorder %s18, 1
      %p58 = por %p56, %p57
      %p59 = scmp.ne.s32.totalorder %s51, %s54
      %p60 = scmp.eq.s32.totalorder %s18, 0
      %p61 = por %p59, %p60
      %p62 = scmp.ne.s32.totalorder %s51, %s54
      %p63 = scmp.eq.s32.totalorder %s23, 1
      %p64 = por %p62, %p63
      %p65 = scmp.ne.s32.totalorder %s54, %s55
      %p66 = scmp.eq.s32.totalorder %s23, 0
      %p67 = por %p65, %p66
      %p68 = scmp.ne.s32.totalorder %s54, %s55
      %p69 = scmp.eq.s32.totalorder %s24, 1
      %p70 = por %p68, %p69
      %p72 = scmp.ne.s32.totalorder %s55, %s71
      %p73 = scmp.eq.s32.totalorder %s24, 0
      %p74 = por %p72, %p73
      %s75 = ssub.s32 %s25, %s44
      %s76 = ssub.s32 %s27, %s36
      %s77 = sor.u32 %s75, %s76
      %p78 = scmp.eq.s32.totalorder %s77, 0
      %s80 = sadd.s32 %s79, 1
      %s81 = scalar_select %p78, %s79, %s80
      %p84 = pneg %p78
      %p85 = scmp.eq.s32.totalorder %s18, 1
      %p86 = por %p84, %p85
      %p87 = scmp.ne.s32.totalorder %s79, %s82
      %p88 = scmp.eq.s32.totalorder %s18, 0
      %p89 = por %p87, %p88
      %p90 = scmp.ne.s32.totalorder %s79, %s82
      %p91 = scmp.eq.s32.totalorder %s23, 1
      %p92 = por %p90, %p91
      %p93 = scmp.ne.s32.totalorder %s82, %s83
      %p94 = scmp.eq.s32.totalorder %s23, 0
      %p95 = por %p93, %p94
      %p96 = scmp.ne.s32.totalorder %s82, %s83
      %p97 = scmp.eq.s32.totalorder %s24, 1
      %p98 = por %p96, %p97
      %p100 = scmp.ne.s32.totalorder %s83, %s99
      %p101 = scmp.eq.s32.totalorder %s24, 0
      %p102 = por %p100, %p101
      %s104 = sadd.s32 %s103, 1
      %p107 = scmp.eq.s32.totalorder %s18, 1
      %p108 = scmp.ne.s32.totalorder %s103, %s105
      %p109 = scmp.eq.s32.totalorder %s18, 0
      %p110 = por %p108, %p109
      %p111 = scmp.ne.s32.totalorder %s103, %s105
      %p112 = scmp.eq.s32.totalorder %s23, 1
      %p113 = por %p111, %p112
      %p114 = scmp.ne.s32.totalorder %s105, %s106
      %p115 = scmp.eq.s32.totalorder %s23, 0
      %p116 = por %p114, %p115
      %p117 = scmp.ne.s32.totalorder %s105, %s106
      %p118 = scmp.eq.s32.totalorder %s24, 1
      %p119 = por %p117, %p118
      %p121 = scmp.ne.s32.totalorder %s106, %s120
      %p122 = scmp.eq.s32.totalorder %s24, 0
      %p123 = por %p121, %p122
      %s124 = ssub.s32 %s25, %s44
      %s125 = ssub.s32 %s26, %s40
      %s126 = sor.u32 %s124, %s125
      %p127 = scmp.eq.s32.totalorder %s126, 0
      %s129 = sadd.s32 %s128, 1
      %s130 = scalar_select %p127, %s128, %s129
      %p133 = pneg %p127
      %p134 = scmp.eq.s32.totalorder %s18, 1
      %p135 = por %p133, %p134
      %p136 = scmp.ne.s32.totalorder %s128, %s131
      %p137 = scmp.eq.s32.totalorder %s18, 0
      %p138 = por %p136, %p137
      %p139 = scmp.ne.s32.totalorder %s128, %s131
      %p140 = scmp.eq.s32.totalorder %s23, 1
      %p141 = por %p139, %p140
      %p142 = scmp.ne.s32.totalorder %s131, %s132
      %p143 = scmp.eq.s32.totalorder %s23, 0
      %p144 = por %p142, %p143
      %p145 = scmp.ne.s32.totalorder %s131, %s132
      %p146 = scmp.eq.s32.totalorder %s24, 1
      %p147 = por %p145, %p146
      %p149 = scmp.ne.s32.totalorder %s132, %s148
      %p150 = scmp.eq.s32.totalorder %s24, 0
      %p151 = por %p149, %p150
      %p152 = scmp.le.s32.totalorder 1, %s18
      %p153 = scmp.lt.s32.totalorder %s18, 3
      %p154 = pnand %p152, %p153
      %p155 = pneg %p154
      // Predicated region
      $region9: #{tpu_custom_call.1} parent=5 // pred_check
        _
      $region10: #{tpu_custom_call.1} parent=5 // pred_check_branch
        %157 = sbr.rel (%p154) target = $region12
      $region11: #{tpu_custom_call.1} parent=5 // pred_region
        %s158 = ssub.s32 %s18, 1
        // Predicated region
        $region13: #{tpu_custom_call.1} parent=11 // pred_check
          %p159 = pneg %p116
        $region14: #{tpu_custom_call.1} parent=11 // pred_check_branch
          %161 = sbr.rel (%p159) target = $region16
        $region15: #{tpu_custom_call.1} parent=11 // pred_region
          %s163 = ssub.s32 2048, 2048
          %164 = vsyncadd [#allocation7], %s163
          %s165 = sshll.u32 [#allocation8], 4
          %s166 = int_to_ptr.vmem [resolvable:$true] %s165
          %171 = dma.hbm_to_vmem [thread:$0]  %s2, 2048, %s166, [#allocation7], 128, 128, 8
        $region16: #{tpu_custom_call.1} parent=11 // pred_fallthru
          _
      $region12: #{tpu_custom_call.1} parent=5 // pred_fallthru
        _
      %p172 = scmp.lt.s32.totalorder %s18, 2
      // Predicated region
      $region17: #{tpu_custom_call.1} parent=5 // pred_check
        %p173 = pneg %p172
      $region18: #{tpu_custom_call.1} parent=5 // pred_check_branch
        %175 = sbr.rel (%p173) target = $region20
      $region19: #{tpu_custom_call.1} parent=5 // pred_region
        // Predicated region
        $region21: #{tpu_custom_call.1} parent=19 // pred_check
          %p176 = pneg %p61
        $region22: #{tpu_custom_call.1} parent=19 // pred_check_branch
          %178 = sbr.rel (%p176) target = $region24
        $region23: #{tpu_custom_call.1} parent=19 // pred_region
          %s179 = sand.u32 %s51, 1
          %s180 = scalar_lea.sflag [#allocation4], %s179
          %s181 = sand.u32 %s51, 1
          %s182 = smul.addr %s181, 8
          %s183 = scalar_lea.vmem [#allocation3], %s182
          %s185 = ssub.s32 128, 128
          %186 = vsyncadd %s180, %s185
          %s187 = sadd.s32 %s27, %s26
          %s188 = sadd.s32 %s187, %s25
          %s189 = smul.addr %s188, 128
          %s190 = scalar_lea.hbm %s0, %s189
          %s192 = sshll.u32 %s183, 4
          %s193 = int_to_ptr.vmem [resolvable:$true] %s192
          %195 = dma.hbm_to_vmem [thread:$0]  %s190, 128, %s193, %s180
        $region24: #{tpu_custom_call.1} parent=19 // pred_fallthru
          _
        // Predicated region
        $region25: #{tpu_custom_call.1} parent=19 // pred_check
          %p196 = pneg %p89
        $region26: #{tpu_custom_call.1} parent=19 // pred_check_branch
          %198 = sbr.rel (%p196) target = $region28
        $region27: #{tpu_custom_call.1} parent=19 // pred_region
          %s199 = sand.u32 %s18, 1
          %s200 = scalar_lea.sflag [#allocation7], %s199
          %s201 = sand.u32 %s79, 1
          %s202 = smul.addr %s201, 8
          %s203 = scalar_lea.vmem [#allocation6], %s202
          %s205 = ssub.s32 128, 128
          %206 = vsyncadd %s200, %s205
          %s207 = sadd.s32 %s27, %s25
          %s208 = smul.addr %s207, 128
          %s209 = scalar_lea.hbm %s1, %s208
          %s211 = sshll.u32 %s203, 4
          %s212 = int_to_ptr.vmem [resolvable:$true] %s211
          %214 = dma.hbm_to_vmem [thread:$0]  %s209, 128, %s212, %s200
        $region28: #{tpu_custom_call.1} parent=19 // pred_fallthru
          _
      $region20: #{tpu_custom_call.1} parent=5 // pred_fallthru
        _
      %p215 = scmp.le.s32.totalorder 1, %s18
      %p216 = scmp.lt.s32.totalorder %s18, 3
      %p217 = pnand %p215, %p216
      %p218 = pneg %p217
      // Predicated region
      $region29: #{tpu_custom_call.1} parent=5 // pred_check
        _
      $region30: #{tpu_custom_call.1} parent=5 // pred_check_branch
        %220 = sbr.rel (%p217) target = $region32
      $region31: #{tpu_custom_call.1} parent=5 // pred_region
        %s221 = ssub.s32 %s18, 1
        %s222 = sand.u32 %s54, 1
        %s223 = scalar_lea.sflag [#allocation4], %s222
        %s224 = sand.u32 %s54, 1
        %s225 = smul.addr %s224, 8
        %s226 = scalar_lea.vmem [#allocation3], %s225
        // Predicated region
        $region33: #{tpu_custom_call.1} parent=31 // pred_check
          %p227 = pneg %p67
        $region34: #{tpu_custom_call.1} parent=31 // pred_check_branch
          %229 = sbr.rel (%p227) target = $region36
        $region35: #{tpu_custom_call.1} parent=31 // pred_region
          %230 = dma.done %s223, 128
        $region36: #{tpu_custom_call.1} parent=31 // pred_fallthru
          _
        %s231 = sand.u32 %s23, 1
        %s232 = scalar_lea.sflag [#allocation7], %s231
        %s233 = sand.u32 %s82, 1
        %s234 = smul.addr %s233, 8
        %s235 = scalar_lea.vmem [#allocation6], %s234
        // Predicated region
        $region37: #{tpu_custom_call.1} parent=31 // pred_check
          %p236 = pneg %p95
        $region38: #{tpu_custom_call.1} parent=31 // pred_check_branch
          %238 = sbr.rel (%p236) target = $region40
        $region39: #{tpu_custom_call.1} parent=31 // pred_region
          %239 = dma.done %s232, 128
        $region40: #{tpu_custom_call.1} parent=31 // pred_fallthru
          _
        // Predicated region
        $region41: #{tpu_custom_call.1} parent=31 // pred_check
          %p240 = pneg %p116
        $region42: #{tpu_custom_call.1} parent=31 // pred_check_branch
          %242 = sbr.rel (%p240) target = $region44
        $region43: #{tpu_custom_call.1} parent=31 // pred_region
          %243 = dma.done [#allocation7], 2048
        $region44: #{tpu_custom_call.1} parent=31 // pred_fallthru
          _
        %s244 = sand.u32 %s54, 1
        %s245 = scalar_lea.sflag [#allocation4], %s244
        %s246 = sand.u32 %s54, 1
        %s247 = smul.addr %s246, 8
        %s248 = scalar_lea.vmem [#allocation3], %s247
        %p249 = pneg %p67
        %p250 = pneg %p64
        %s251 = sand.u32 %s23, 1
        %s252 = scalar_lea.sflag [#allocation7], %s251
        %s253 = sand.u32 %s82, 1
        %s254 = smul.addr %s253, 8
        %s255 = scalar_lea.vmem [#allocation6], %s254
        %p256 = pneg %p95
        %p257 = pneg %p92
        %p258 = pneg %p116
        %p259 = pneg %p113
        %p260 = pneg %p144
        %p261 = pneg %p141
        %s262 = sand.u32 %s131, 1
        %s263 = scalar_lea.sflag [#allocation5], %s262
        %s264 = sand.u32 %s131, 1
        %s265 = smul.addr %s264, 8
        %s266 = scalar_lea.vmem [#allocation9], %s265
        %p267 = scmp.eq.s32.totalorder %s30, 0
        // Predicated region
        $region45: #{tpu_custom_call.1} parent=31 // pred_check
          %p268 = pneg %p267
        $region46: #{tpu_custom_call.1} parent=31 // pred_check_branch
          %270 = sbr.rel (%p268) target = $region48
        $region47: #{tpu_custom_call.1} parent=31 // pred_region
          %271 = vst [vmem:[#allocation2] sm:$0xff] 0.0
        $region48: #{tpu_custom_call.1} parent=31 // pred_fallthru
          _
        %v272 = vld [vmem:[#allocation2] sm:$0xff]
        %v273 = vld [vmem:[%s226] sm:$0xff]
        %v274 = vld [vmem:[%s235] sm:$0xff]
        %vm275 = vcmask 64512
        %v277 = vsel %vm275, %v273, 0
        %279 = vmatprep.subr.mxu0 0.0
        %280 = vmatpush1.msra.mxu0 %v274
        %281 = vmatprep.subr.mxu0 0.0
        %282 = vmatpush1.msra.mxu0 0.0
        %283 = vmatprep.subr.mxu0 0.0
        %284 = vmatpush1.msra.mxu0 0.0
        %285 = vmatprep.subr.mxu0 0.0
        %286 = vmatpush1.msra.mxu0 0.0
        %287 = vmatprep.subr.mxu0 0.0
        %288 = vmatpush1.msra.mxu0 0.0
        %289 = vmatprep.subr.mxu0 0.0
        %290 = vmatpush1.msra.mxu0 0.0
        %291 = vmatprep.subr.mxu0 0.0
        %292 = vmatpush1.msra.mxu0 0.0
        %293 = vmatprep.subr.mxu0 0.0
        %294 = vmatpush1.msra.mxu0 0.0
        %295 = vmatprep.subr.mxu0 0.0
        %296 = vmatpush1.msra.mxu0 0.0
        %297 = vmatprep.subr.mxu0 0.0
        %298 = vmatpush1.msra.mxu0 0.0
        %299 = vmatprep.subr.mxu0 0.0
        %300 = vmatpush1.msra.mxu0 0.0
        %301 = vmatprep.subr.mxu0 0.0
        %302 = vmatpush1.msra.mxu0 0.0
        %303 = vmatprep.subr.mxu0 0.0
        %304 = vmatpush1.msra.mxu0 0.0
        %305 = vmatprep.subr.mxu0 0.0
        %306 = vmatpush1.msra.mxu0 0.0
        %307 = vmatprep.subr.mxu0 0.0
        %308 = vmatpush1.msra.mxu0 0.0
        %309 = vmatprep.subr.mxu0 0.0
        %310 = vmatpush1.msra.mxu0 0.0
        %311 = vmatprep.subr.mxu0 0.0
        %312 = vmatpush1.msra.mxu0 0.0
        %313 = vmatprep.subr.mxu0 0.0
        %314 = vmatpush1.msra.mxu0 0.0
        %315 = vmatprep.subr.mxu0 0.0
        %316 = vmatpush1.msra.mxu0 0.0
        %317 = vmatprep.subr.mxu0 0.0
        %318 = vmatpush1.msra.mxu0 0.0
        %319 = vmatprep.subr.mxu0 0.0
        %320 = vmatpush1.msra.mxu0 0.0
        %321 = vmatprep.subr.mxu0 0.0
        %322 = vmatpush1.msra.mxu0 0.0
        %323 = vmatprep.subr.mxu0 0.0
        %324 = vmatpush1.msra.mxu0 0.0
        %325 = vmatprep.subr.mxu0 0.0
        %326 = vmatpush1.msra.mxu0 0.0
        %327 = vmatprep.subr.mxu0 0.0
        %328 = vmatpush1.msra.mxu0 0.0
        %329 = vmatprep.subr.mxu0 0.0
        %330 = vmatpush1.msra.mxu0 0.0
        %331 = vmatprep.subr.mxu0 0.0
        %332 = vmatpush1.msra.mxu0 0.0
        %333 = vmatprep.subr.mxu0 0.0
        %334 = vmatpush1.msra.mxu0 0.0
        %335 = vmatprep.subr.mxu0 0.0
        %336 = vmatpush1.msra.mxu0 0.0
        %337 = vmatprep.subr.mxu0 0.0
        %338 = vmatpush1.msra.mxu0 0.0
        %339 = vmatprep.subr.mxu0 0.0
        %340 = vmatpush1.msra.mxu0 0.0
        %341 = vmatprep.subr.mxu0 0.0
        %342 = vmatpush1.msra.mxu0 0.0
        %343 = vmatprep.mubr.f32.mxu0 0.0
        %344 = vmatmul.mubr.f32.gmra.mrb[0].mxu0 %v277
        %v345 = vpop.f32.mrb[0].mxu0
        %v346 = vadd.f32 0.0, %v345
        %v347 = vpop.f32.mrb[0].mxu0
        %348 = vdwg.mxu0
        %v349 = vadd.f32 %v272, %v346
        %350 = vst [vmem:[#allocation2] sm:$0xff] %v349
        // Predicated region
        $region49: #{tpu_custom_call.1} parent=31 // pred_check
          %p351 = pneg %p267
        $region50: #{tpu_custom_call.1} parent=31 // pred_check_branch
          %353 = sbr.rel (%p351) target = $region52
        $region51: #{tpu_custom_call.1} parent=31 // pred_region
          %v354 = vld [vmem:[#allocation2] sm:$0xff]
          %v355 = vld [vmem:[#allocation8] sm:$0xff]
          %v356 = vld [vmem:[#allocation8 + $0x8] sm:$0xff]
          %v357 = vld [vmem:[#allocation8 + $0x10] sm:$0xff]
          %v358 = vld [vmem:[#allocation8 + $0x18] sm:$0xff]
          %v359 = vld [vmem:[#allocation8 + $0x20] sm:$0xff]
          %v360 = vld [vmem:[#allocation8 + $0x28] sm:$0xff]
          %v361 = vld [vmem:[#allocation8 + $0x30] sm:$0xff]
          %v362 = vld [vmem:[#allocation8 + $0x38] sm:$0xff]
          %v363 = vld [vmem:[#allocation8 + $0x40] sm:$0xff]
          %v364 = vld [vmem:[#allocation8 + $0x48] sm:$0xff]
          %v365 = vld [vmem:[#allocation8 + $0x50] sm:$0xff]
          %v366 = vld [vmem:[#allocation8 + $0x58] sm:$0xff]
          %v367 = vld [vmem:[#allocation8 + $0x60] sm:$0xff]
          %v368 = vld [vmem:[#allocation8 + $0x68] sm:$0xff]
          %v369 = vld [vmem:[#allocation8 + $0x70] sm:$0xff]
          %v370 = vld [vmem:[#allocation8 + $0x78] sm:$0xff]
          %371 = vmatprep.subr.mxu0 0.0
          %372 = vmatpush1.msra.mxu0 %v355
          %373 = vmatprep.subr.mxu0 0.0
          %374 = vmatpush1.msra.mxu0 %v356
          %375 = vmatprep.subr.mxu0 0.0
          %376 = vmatpush1.msra.mxu0 %v357
          %377 = vmatprep.subr.mxu0 0.0
          %378 = vmatpush1.msra.mxu0 %v358
          %379 = vmatprep.subr.mxu0 0.0
          %380 = vmatpush1.msra.mxu0 %v359
          %381 = vmatprep.subr.mxu0 0.0
          %382 = vmatpush1.msra.mxu0 %v360
          %383 = vmatprep.subr.mxu0 0.0
          %384 = vmatpush1.msra.mxu0 %v361
          %385 = vmatprep.subr.mxu0 0.0
          %386 = vmatpush1.msra.mxu0 %v362
          %387 = vmatprep.subr.mxu0 0.0
          %388 = vmatpush1.msra.mxu0 %v363
          %389 = vmatprep.subr.mxu0 0.0
          %390 = vmatpush1.msra.mxu0 %v364
          %391 = vmatprep.subr.mxu0 0.0
          %392 = vmatpush1.msra.mxu0 %v365
          %393 = vmatprep.subr.mxu0 0.0
          %394 = vmatpush1.msra.mxu0 %v366
          %395 = vmatprep.subr.mxu0 0.0
          %396 = vmatpush1.msra.mxu0 %v367
          %397 = vmatprep.subr.mxu0 0.0
          %398 = vmatpush1.msra.mxu0 %v368
          %399 = vmatprep.subr.mxu0 0.0
          %400 = vmatpush1.msra.mxu0 %v369
          %401 = vmatprep.subr.mxu0 0.0
          %402 = vmatpush1.msra.mxu0 %v370
          %403 = vmatprep.subr.mxu0 0.0
          %404 = vmatpush1.msra.mxu0 0.0
          %405 = vmatprep.subr.mxu0 0.0
          %406 = vmatpush1.msra.mxu0 0.0
          %407 = vmatprep.subr.mxu0 0.0
          %408 = vmatpush1.msra.mxu0 0.0
          %409 = vmatprep.subr.mxu0 0.0
          %410 = vmatpush1.msra.mxu0 0.0
          %411 = vmatprep.subr.mxu0 0.0
          %412 = vmatpush1.msra.mxu0 0.0
          %413 = vmatprep.subr.mxu0 0.0
          %414 = vmatpush1.msra.mxu0 0.0
          %415 = vmatprep.subr.mxu0 0.0
          %416 = vmatpush1.msra.mxu0 0.0
          %417 = vmatprep.subr.mxu0 0.0
          %418 = vmatpush1.msra.mxu0 0.0
          %419 = vmatprep.subr.mxu0 0.0
          %420 = vmatpush1.msra.mxu0 0.0
          %421 = vmatprep.subr.mxu0 0.0
          %422 = vmatpush1.msra.mxu0 0.0
          %423 = vmatprep.subr.mxu0 0.0
          %424 = vmatpush1.msra.mxu0 0.0
          %425 = vmatprep.subr.mxu0 0.0
          %426 = vmatpush1.msra.mxu0 0.0
          %427 = vmatprep.subr.mxu0 0.0
          %428 = vmatpush1.msra.mxu0 0.0
          %429 = vmatprep.subr.mxu0 0.0
          %430 = vmatpush1.msra.mxu0 0.0
          %431 = vmatprep.subr.mxu0 0.0
          %432 = vmatpush1.msra.mxu0 0.0
          %433 = vmatprep.subr.mxu0 0.0
          %434 = vmatpush1.msra.mxu0 0.0
          %435 = vmatprep.mubr.f32.mxu0 0.0
          %436 = vmatmul.mubr.f32.gmra.mrb[0].mxu0 %v354
          %v437 = vpop.f32.mrb[0].mxu0
          %v438 = vadd.f32 0.0, %v437
          %v439 = vpop.f32.mrb[0].mxu0
          %440 = vdwg.mxu0
          %441 = vst [vmem:[%s266] sm:$0xff] %v438
        $region52: #{tpu_custom_call.1} parent=31 // pred_fallthru
          _
        %s442 = sand.u32 %s131, 1
        %s443 = scalar_lea.sflag [#allocation5], %s442
        %s444 = sand.u32 %s131, 1
        %s445 = smul.addr %s444, 8
        %s446 = scalar_lea.vmem [#allocation9], %s445
        // Predicated region
        $region53: #{tpu_custom_call.1} parent=31 // pred_check
          %p447 = pneg %p141
        $region54: #{tpu_custom_call.1} parent=31 // pred_check_branch
          %449 = sbr.rel (%p447) target = $region56
        $region55: #{tpu_custom_call.1} parent=31 // pred_region
          %s451 = ssub.s32 128, 128
          %452 = vsyncadd %s443, %s451
          %s453 = sadd.s32 %s29, %s28
          %s454 = smul.addr %s453, 128
          %s455 = scalar_lea.hbm %s3, %s454
          %s457 = sshll.u32 %s446, 4
          %s458 = int_to_ptr.vmem [resolvable:$true] %s457
          %460 = dma.vmem_to_hbm [thread:$0]  %s458, 128, %s455, %s443
        $region56: #{tpu_custom_call.1} parent=31 // pred_fallthru
          _
      $region32: #{tpu_custom_call.1} parent=5 // pred_fallthru
        _
      %p461 = scmp.le.s32.totalorder 2, %s18
      // Predicated region
      $region57: #{tpu_custom_call.1} parent=5 // pred_check
        %p462 = pneg %p461
      $region58: #{tpu_custom_call.1} parent=5 // pred_check_branch
        %464 = sbr.rel (%p462) target = $region60
      $region59: #{tpu_custom_call.1} parent=5 // pred_region
        %s465 = ssub.s32 %s18, 2
        // Predicated region
        $region61: #{tpu_custom_call.1} parent=59 // pred_check
          %p466 = pneg %p147
        $region62: #{tpu_custom_call.1} parent=59 // pred_check_branch
          %468 = sbr.rel (%p466) target = $region64
        $region63: #{tpu_custom_call.1} parent=59 // pred_region
          %s469 = sand.u32 %s132, 1
          %s470 = scalar_lea.sflag [#allocation5], %s469
          %s471 = sand.u32 %s132, 1
          %s472 = smul.addr %s471, 8
          %s473 = scalar_lea.vmem [#allocation9], %s472
          %474 = dma.done %s470, 128
        $region64: #{tpu_custom_call.1} parent=59 // pred_fallthru
          _
      $region60: #{tpu_custom_call.1} parent=5 // pred_fallthru
        _
    $region6: #{tpu_custom_call.1} parent=1 // loop_footer
      %s22 = sadd.s32 1, %s18
    $region7: #{tpu_custom_call.1} parent=1 // loop_footer_branch
      %17 = sbr.rel target = $region3
    $region8: #{tpu_custom_call.1} parent=1 // loop_exit
      _
    %475 = vsyncpa [#allocation4], 1
    %s476 = scalar_lea.sflag [#allocation4], 1
    %477 = vsyncpa %s476, 1
    %478 = vsyncpa [#allocation7], 1
    %s479 = scalar_lea.sflag [#allocation7], 1
    %480 = vsyncpa %s479, 1
    %481 = vsyncpa [#allocation5], 1
    %s482 = scalar_lea.sflag [#allocation5], 1
    %483 = vsyncpa %s482, 1

</llo_original>
